<compile_context>
chip_gen: v5e
topology: v5e:2x2
jax: 0.10.0
libtpu: 0.0.40
codegen_flags: <defaults>
</compile_context>

<pallas_src>
import functools

import jax
import jax.numpy as jnp
from jax.experimental import pallas as pl
from jax.experimental.pallas import tpu as pltpu

LANE = 128  # TPU lane width: weight/bias output dims are padded to this.


def _round_up(n, m):
    return ((n + m - 1) // m) * m


def _pick_tm(m):
    """Batch tile: fill the MXU (256 rows on v6e/v7x) but keep >= 2 grid steps."""
    if m >= 2048:
        return 512
    if m > 256:
        return 256
    return 128


def _vmem_limit_bytes():
    """Generation-aware VMEM budget: ~75% of capacity, capped at 96 MiB."""
    try:
        cap = pltpu.get_tpu_info().vmem_capacity_bytes
        return min(int(cap * 3 // 4), 96 * 1024 * 1024)
    except Exception:  # pragma: no cover - conservative fallback
        return 48 * 1024 * 1024


# ----------------------------------------------------------------------------
# Kernel
# ----------------------------------------------------------------------------
def _mlp_fused_kernel(*refs, n_layers):
    """One batch-tile of the full MLP (all layers unrolled, all weights resident).

    refs = (x_ref, w0_ref, b0_ref, w1_ref, b1_ref, ..., o_ref)
      x_ref : (tm, D0)   input dtype (cast to compute dtype in-kernel)
      wl_ref: (Kl, Nlp)  compute dtype, (in, out) layout, out dim lane-padded
      bl_ref: (1,  Nlp)  f32
      o_ref : (tm, NLp)  out dtype
    ReLU after every layer except the last (PyTorch: `if i != self.depth`).
    """
    x_ref = refs[0]
    o_ref = refs[-1]
    layer_refs = refs[1:-1]
    compute_dtype = layer_refs[0].dtype

    h = x_ref[...].astype(compute_dtype)
    y = h  # overwritten below (n_layers >= 1 is guaranteed by the wrapper)
    for l in range(n_layers):                     # static unroll over layers
        w_ref = layer_refs[2 * l]
        b_ref = layer_refs[2 * l + 1]
        # MXU matmul with f32 accumulation; bias add + ReLU stay in f32 (VPU).
        y = jnp.dot(h, w_ref[...], preferred_element_type=jnp.float32)
        y = y + b_ref[...]
        if l != n_layers - 1:
            h = jnp.maximum(y, 0.0).astype(compute_dtype)
    o_ref[...] = y.astype(o_ref.dtype)


# ----------------------------------------------------------------------------
# One-time parameter preparation (hoisted out of the per-call path)
# ----------------------------------------------------------------------------
def prepare_mlp_params(params, *, compute_dtype=jnp.bfloat16):
    """Pad + cast the weight stack ONCE (call at init time, not per forward).

    params: list of (w_t, b) with w_t (in, out) f32 and b (1, out) (or (out,)).
    Returns (layers, out_size):
      layers  : tuple of (w_p (K, Np) compute_dtype, b_p (1, Np) f32)
                where the first K equals input_size (x is passed unpadded) and
                subsequent K match the previous padded output width.
      out_size: unpadded output width (python int, for the final column slice).

    Zero padding is semantics-preserving: padded K-rows are zero, padded bias
    lanes are zero, ReLU(0) = 0, so padded hidden lanes stay exactly zero.
    Use compute_dtype=jnp.float32 for full-f32 semantics (slower on the MXU).
    """
    if not params:
        raise ValueError("MLP must have at least one Linear layer.")
    layers = []
    k_p = params[0][0].shape[0]  # first layer K = input_size (x stays unpadded)
    for (w_t, b) in params:
        k, n = w_t.shape
        n_p = _round_up(n, LANE)
        w_p = jnp.zeros((k_p, n_p), compute_dtype).at[:k, :n].set(
            w_t.astype(compute_dtype))
        b_p = jnp.zeros((1, n_p), jnp.float32).at[:, :n].set(
            jnp.reshape(b, (1, n)).astype(jnp.float32))
        layers.append((w_p, b_p))
        k_p = n_p
    out_size = params[-1][0].shape[1]
    return tuple(layers), out_size


# ----------------------------------------------------------------------------
# Forward
# ----------------------------------------------------------------------------
def mlp_forward(x, layers, *, out_size=None, tm=None,
                out_dtype=jnp.float32, weight_buffer_count=None):
    """Full MLP forward in one fused Pallas kernel.

    x:      (M, input_size), any float dtype.
    layers: output of prepare_mlp_params (already padded & cast).
    out_size: unpadded output width (python int) for the final column slice;
              None returns the lane-padded output.
    out_dtype: jnp.bfloat16 halves output HBM writeback if downstream accepts.
    weight_buffer_count: set to 1 to single-buffer the constant weight/bias
              blocks via pl.Buffered (halves resident weight VMEM on v7x).
              Default None keeps the standard pipelining (max compatibility).
    """
    if not layers:
        raise ValueError("MLP must have at least one Linear layer.")
    M, in_features = x.shape
    if layers[0][0].shape[0] != in_features:
        raise ValueError("x feature dim does not match prepared params.")
    n_layers = len(layers)
    out_p = layers[-1][0].shape[1]

    if tm is None:
        tm = _pick_tm(M)
    grid = (pl.cdiv(M, tm),)   # no batch padding: Pallas masks the partial tile

    def _const_spec(shape):
        # Constant index_map -> block never changes across grid steps.
        if weight_buffer_count is None:
            return pl.BlockSpec(shape, lambda i: (0, 0))
        return pl.BlockSpec(shape, lambda i: (0, 0),
                            pipeline_mode=pl.Buffered(weight_buffer_count))

    in_specs = [pl.BlockSpec((tm, in_features), lambda i: (i, 0))]
    flat_inputs = [x]
    for (w_p, b_p) in layers:
        in_specs.append(_const_spec(w_p.shape))
        in_specs.append(_const_spec(b_p.shape))
        flat_inputs += [w_p, b_p]

    kernel = functools.partial(_mlp_fused_kernel, n_layers=n_layers)

    out = pl.pallas_call(
        kernel,
        out_shape=jax.ShapeDtypeStruct((M, out_p), out_dtype),
        grid=grid,
        in_specs=in_specs,
        out_specs=pl.BlockSpec((tm, out_p), lambda i: (i, 0)),
        compiler_params=pltpu.CompilerParams(
            dimension_semantics=("parallel",),   # megacore over batch tiles
            vmem_limit_bytes=_vmem_limit_bytes(),
        ),
    )(*flat_inputs)

    if out_size is not None and out_size != out_p:
        out = out[:, :out_size]
    return out


# ----------------------------------------------------------------------------
# Params / references (matching the PyTorch module)
# ----------------------------------------------------------------------------
def init_mlp_params(key, input_size, hidden_size, output_size, depth):
    """Deterministic params matching the PyTorch module's layer shapes.

    Layer list (depth+1 Linear layers): [in->h] + (depth-1)*[h->h] + [h->out].
    Weights stored already transposed to (in, out) for the kernel.
    """
    sizes = [(input_size, hidden_size)]
    sizes += [(hidden_size, hidden_size)] * (depth - 1)
    sizes += [(hidden_size, output_size)]

    params = []
    for (fan_in, fan_out) in sizes:
        key, wk, bk = jax.random.split(key, 3)
        bound = 1.0 / jnp.sqrt(jnp.float32(fan_in))  # PyTorch default init range
        w_t = jax.random.uniform(wk, (fan_in, fan_out), jnp.float32, -bound, bound)
        b = jax.random.uniform(bk, (1, fan_out), jnp.float32, -bound, bound)
        params.append((w_t, b))
    return params


def mlp_reference_f32(x, params, depth):
    """Pure-f32 JAX reference (PyTorch semantics)."""
    h = x.astype(jnp.float32)
    for i, (w_t, b) in enumerate(params):
        h = h @ w_t + b
        if i != depth:
            h = jnp.maximum(h, 0.0)
    return h


def mlp_reference_mixed(x, params, depth, compute_dtype=jnp.bfloat16):
    """Emulates the kernel's precision: bf16 matmul operands, f32 accumulate."""
    h = x.astype(jnp.float32)
    for i, (w_t, b) in enumerate(params):
        y = jnp.dot(h.astype(compute_dtype), w_t.astype(compute_dtype),
                    preferred_element_type=jnp.float32) + b
        if i != depth:
            y = jnp.maximum(y, 0.0)
        h = y
    return h


if __name__ == "__main__":
    # Small, MLP-consistent shapes.  batch=200 is not a multiple of the 128-row
    # tile (exercises the partial last tile) and yields a 2-step parallel grid.
    batch = 200
    input_size = 32
    hidden_size = 64
    output_size = 16
    depth = 3

    key = jax.random.PRNGKey(0)
    key, xk = jax.random.split(key)
    x = jax.random.normal(xk, (batch, input_size), jnp.float32)

    params = init_mlp_params(key, input_size, hidden_size, output_size, depth)

    # One-time preparation (pad + bf16 cast), hoisted out of the hot path.
    layers, out_size = prepare_mlp_params(params, compute_dtype=jnp.bfloat16)

    fwd = jax.jit(functools.partial(mlp_forward, out_size=out_size))
    out = jax.block_until_ready(fwd(x, layers))

    assert out.shape == (batch, output_size)
    assert out.dtype == jnp.float32

    ref_mixed = mlp_reference_mixed(x, params, depth)   # same precision recipe
    ref_f32 = mlp_reference_f32(x, params, depth)       # full-f32 semantics

    assert jnp.allclose(out, ref_mixed, atol=2e-3, rtol=2e-3), (
        "mismatch vs mixed-precision reference")
    assert jnp.allclose(out, ref_f32, atol=8e-2, rtol=8e-2), (
        "mismatch vs f32 reference")

    # Optional bf16-output path (halves output writeback); same compute, only
    # the final store dtype changes.
    fwd_bf16 = jax.jit(functools.partial(
        mlp_forward, out_size=out_size, out_dtype=jnp.bfloat16))
    out_bf16 = jax.block_until_ready(fwd_bf16(x, layers))
    assert out_bf16.dtype == jnp.bfloat16
    assert jnp.allclose(out_bf16.astype(jnp.float32), out, atol=2e-2, rtol=2e-2), (
        "bf16-output variant deviates from f32-output kernel")

    print("KERNEL_OK")
</pallas_src>

<mosaic_0001>
module attributes {stable_mosaic.version = 11 : i64} {
  func.func @_mlp_fused_kernel(%arg0: i32, %arg1: memref<128x32xf32, #tpu.memory_space<vmem>>, %arg2: memref<32x128xbf16, #tpu.memory_space<vmem>>, %arg3: memref<1x128xf32, #tpu.memory_space<vmem>>, %arg4: memref<128x128xbf16, #tpu.memory_space<vmem>>, %arg5: memref<1x128xf32, #tpu.memory_space<vmem>>, %arg6: memref<128x128xbf16, #tpu.memory_space<vmem>>, %arg7: memref<1x128xf32, #tpu.memory_space<vmem>>, %arg8: memref<128x128xbf16, #tpu.memory_space<vmem>>, %arg9: memref<1x128xf32, #tpu.memory_space<vmem>>, %arg10: memref<128x128xf32, #tpu.memory_space<vmem>>) attributes {dimension_semantics = [#tpu.dimension_semantics<parallel>], iteration_bounds = array<i64: 2>, scalar_prefetch = 0 : i64, scratch_operands = 0 : i64, tpu.core_type = #tpu.core_type<tc>, window_params = [{transform_indices = @transform_0, window_bounds = array<i64: 128, 32>}, {pipeline_mode = #tpu.pipeline_mode<synchronous>, transform_indices = @transform_1, window_bounds = array<i64: 32, 128>}, {pipeline_mode = #tpu.pipeline_mode<synchronous>, transform_indices = @transform_2, window_bounds = array<i64: 1, 128>}, {pipeline_mode = #tpu.pipeline_mode<synchronous>, transform_indices = @transform_3, window_bounds = array<i64: 128, 128>}, {pipeline_mode = #tpu.pipeline_mode<synchronous>, transform_indices = @transform_4, window_bounds = array<i64: 1, 128>}, {pipeline_mode = #tpu.pipeline_mode<synchronous>, transform_indices = @transform_5, window_bounds = array<i64: 128, 128>}, {pipeline_mode = #tpu.pipeline_mode<synchronous>, transform_indices = @transform_6, window_bounds = array<i64: 1, 128>}, {pipeline_mode = #tpu.pipeline_mode<synchronous>, transform_indices = @transform_7, window_bounds = array<i64: 128, 128>}, {pipeline_mode = #tpu.pipeline_mode<synchronous>, transform_indices = @transform_8, window_bounds = array<i64: 1, 128>}, {transform_indices = @transform_9, window_bounds = array<i64: 128, 128>}]} {
    %c0 = arith.constant 0 : index
    %c0_0 = arith.constant 0 : index
    %0 = vector.load %arg1[%c0, %c0_0] : memref<128x32xf32, #tpu.memory_space<vmem>>, vector<128x32xf32>
    %1 = arith.truncf %0 : vector<128x32xf32> to vector<128x32xbf16>
    %c0_1 = arith.constant 0 : index
    %c0_2 = arith.constant 0 : index
    %2 = vector.load %arg2[%c0_1, %c0_2] : memref<32x128xbf16, #tpu.memory_space<vmem>>, vector<32x128xbf16>
    %cst = arith.constant dense<0.000000e+00> : vector<128x128xf32>
    %3 = tpu.matmul %1, %2, %cst {dimension_numbers = #tpu.dot_dimension_numbers<[1], [0], [0], [1], [0, 0, 1, 1], [], []>} : vector<128x32xbf16>, vector<32x128xbf16>, vector<128x128xf32> -> vector<128x128xf32>
    %c0_3 = arith.constant 0 : index
    %c0_4 = arith.constant 0 : index
    %4 = vector.load %arg3[%c0_3, %c0_4] : memref<1x128xf32, #tpu.memory_space<vmem>>, vector<1x128xf32>
    %5 = vector.broadcast %4 : vector<1x128xf32> to vector<128x128xf32>
    %6 = arith.addf %3, %5 : vector<128x128xf32>
    %cst_5 = arith.constant 0.000000e+00 : f32
    %7 = vector.broadcast %cst_5 : f32 to vector<128x128xf32>
    %8 = arith.maximumf %6, %7 : vector<128x128xf32>
    %9 = arith.truncf %8 : vector<128x128xf32> to vector<128x128xbf16>
    %c0_6 = arith.constant 0 : index
    %c0_7 = arith.constant 0 : index
    %10 = vector.load %arg4[%c0_6, %c0_7] : memref<128x128xbf16, #tpu.memory_space<vmem>>, vector<128x128xbf16>
    %cst_8 = arith.constant dense<0.000000e+00> : vector<128x128xf32>
    %11 = tpu.matmul %9, %10, %cst_8 {dimension_numbers = #tpu.dot_dimension_numbers<[1], [0], [0], [1], [0, 0, 1, 1], [], []>} : vector<128x128xbf16>, vector<128x128xbf16>, vector<128x128xf32> -> vector<128x128xf32>
    %c0_9 = arith.constant 0 : index
    %c0_10 = arith.constant 0 : index
    %12 = vector.load %arg5[%c0_9, %c0_10] : memref<1x128xf32, #tpu.memory_space<vmem>>, vector<1x128xf32>
    %13 = vector.broadcast %12 : vector<1x128xf32> to vector<128x128xf32>
    %14 = arith.addf %11, %13 : vector<128x128xf32>
    %cst_11 = arith.constant 0.000000e+00 : f32
    %15 = vector.broadcast %cst_11 : f32 to vector<128x128xf32>
    %16 = arith.maximumf %14, %15 : vector<128x128xf32>
    %17 = arith.truncf %16 : vector<128x128xf32> to vector<128x128xbf16>
    %c0_12 = arith.constant 0 : index
    %c0_13 = arith.constant 0 : index
    %18 = vector.load %arg6[%c0_12, %c0_13] : memref<128x128xbf16, #tpu.memory_space<vmem>>, vector<128x128xbf16>
    %cst_14 = arith.constant dense<0.000000e+00> : vector<128x128xf32>
    %19 = tpu.matmul %17, %18, %cst_14 {dimension_numbers = #tpu.dot_dimension_numbers<[1], [0], [0], [1], [0, 0, 1, 1], [], []>} : vector<128x128xbf16>, vector<128x128xbf16>, vector<128x128xf32> -> vector<128x128xf32>
    %c0_15 = arith.constant 0 : index
    %c0_16 = arith.constant 0 : index
    %20 = vector.load %arg7[%c0_15, %c0_16] : memref<1x128xf32, #tpu.memory_space<vmem>>, vector<1x128xf32>
    %21 = vector.broadcast %20 : vector<1x128xf32> to vector<128x128xf32>
    %22 = arith.addf %19, %21 : vector<128x128xf32>
    %cst_17 = arith.constant 0.000000e+00 : f32
    %23 = vector.broadcast %cst_17 : f32 to vector<128x128xf32>
    %24 = arith.maximumf %22, %23 : vector<128x128xf32>
    %25 = arith.truncf %24 : vector<128x128xf32> to vector<128x128xbf16>
    %c0_18 = arith.constant 0 : index
    %c0_19 = arith.constant 0 : index
    %26 = vector.load %arg8[%c0_18, %c0_19] : memref<128x128xbf16, #tpu.memory_space<vmem>>, vector<128x128xbf16>
    %cst_20 = arith.constant dense<0.000000e+00> : vector<128x128xf32>
    %27 = tpu.matmul %25, %26, %cst_20 {dimension_numbers = #tpu.dot_dimension_numbers<[1], [0], [0], [1], [0, 0, 1, 1], [], []>} : vector<128x128xbf16>, vector<128x128xbf16>, vector<128x128xf32> -> vector<128x128xf32>
    %c0_21 = arith.constant 0 : index
    %c0_22 = arith.constant 0 : index
    %28 = vector.load %arg9[%c0_21, %c0_22] : memref<1x128xf32, #tpu.memory_space<vmem>>, vector<1x128xf32>
    %29 = vector.broadcast %28 : vector<1x128xf32> to vector<128x128xf32>
    %30 = arith.addf %27, %29 : vector<128x128xf32>
    %c0_23 = arith.constant 0 : index
    %c0_24 = arith.constant 0 : index
    %31 = vector.load %arg10[%c0_23, %c0_24] : memref<128x128xf32, #tpu.memory_space<vmem>>, vector<128x128xf32>
    tpu.vector_store %arg10[%c0_23, %c0_24], %30 {strides = array<i32>} : memref<128x128xf32, #tpu.memory_space<vmem>>, vector<128x128xf32>,
    return
  }
  func.func @transform_0(%arg0: i32) -> (i32, i32) {
    %c0_i32 = arith.constant 0 : i32
    %c0_i32_0 = arith.constant 0 : i32
    return %arg0, %c0_i32 : i32, i32
  }
  func.func @transform_1(%arg0: i32) -> (i32, i32) {
    %c0_i32 = arith.constant 0 : i32
    %c0_i32_0 = arith.constant 0 : i32
    %c0_i32_1 = arith.constant 0 : i32
    return %c0_i32, %c0_i32_0 : i32, i32
  }
  func.func @transform_2(%arg0: i32) -> (i32, i32) {
    %c0_i32 = arith.constant 0 : i32
    %c0_i32_0 = arith.constant 0 : i32
    %c0_i32_1 = arith.constant 0 : i32
    return %c0_i32, %c0_i32_0 : i32, i32
  }
  func.func @transform_3(%arg0: i32) -> (i32, i32) {
    %c0_i32 = arith.constant 0 : i32
    %c0_i32_0 = arith.constant 0 : i32
    %c0_i32_1 = arith.constant 0 : i32
    return %c0_i32, %c0_i32_0 : i32, i32
  }
  func.func @transform_4(%arg0: i32) -> (i32, i32) {
    %c0_i32 = arith.constant 0 : i32
    %c0_i32_0 = arith.constant 0 : i32
    %c0_i32_1 = arith.constant 0 : i32
    return %c0_i32, %c0_i32_0 : i32, i32
  }
  func.func @transform_5(%arg0: i32) -> (i32, i32) {
    %c0_i32 = arith.constant 0 : i32
    %c0_i32_0 = arith.constant 0 : i32
    %c0_i32_1 = arith.constant 0 : i32
    return %c0_i32, %c0_i32_0 : i32, i32
  }
  func.func @transform_6(%arg0: i32) -> (i32, i32) {
    %c0_i32 = arith.constant 0 : i32
    %c0_i32_0 = arith.constant 0 : i32
    %c0_i32_1 = arith.constant 0 : i32
    return %c0_i32, %c0_i32_0 : i32, i32
  }
  func.func @transform_7(%arg0: i32) -> (i32, i32) {
    %c0_i32 = arith.constant 0 : i32
    %c0_i32_0 = arith.constant 0 : i32
    %c0_i32_1 = arith.constant 0 : i32
    return %c0_i32, %c0_i32_0 : i32, i32
  }
  func.func @transform_8(%arg0: i32) -> (i32, i32) {
    %c0_i32 = arith.constant 0 : i32
    %c0_i32_0 = arith.constant 0 : i32
    %c0_i32_1 = arith.constant 0 : i32
    return %c0_i32, %c0_i32_0 : i32, i32
  }
  func.func @transform_9(%arg0: i32) -> (i32, i32) {
    %c0_i32 = arith.constant 0 : i32
    %c0_i32_0 = arith.constant 0 : i32
    return %arg0, %c0_i32 : i32, i32
  }
}

</mosaic_0001>

<llo_original>
// kernel: mlp_forward.1
$region0: #{mlp_forward.1}
  #allocation0 [shape = 'u32[]', space=smem, size = 0x4, offset = 0x4, fixed_abs, tag = 'smem constant byte address 0x4 - core index']
  #allocation1 [shape = 'u32[72,128]{1,0:T(1,128)}', space=vmem, size = 0x9000, scoped, tag = 'internal scratch']
  %s0 = inlined_call_operand.vmem [shape: f32[200,32], index: 0, kind: input, shape index: {}]
  %s1 = inlined_call_operand.vmem [shape: bf16[32,128], index: 1, kind: input, shape index: {}]
  %s2 = inlined_call_operand.vmem [shape: f32[1,128], index: 2, kind: input, shape index: {}]
  %s3 = inlined_call_operand.vmem [shape: bf16[128,128], index: 3, kind: input, shape index: {}]
  %s4 = inlined_call_operand.vmem [shape: f32[1,128], index: 4, kind: input, shape index: {}]
  %s5 = inlined_call_operand.vmem [shape: bf16[128,128], index: 5, kind: input, shape index: {}]
  %s6 = inlined_call_operand.vmem [shape: f32[1,128], index: 6, kind: input, shape index: {}]
  %s7 = inlined_call_operand.vmem [shape: bf16[128,128], index: 7, kind: input, shape index: {}]
  %s8 = inlined_call_operand.vmem [shape: f32[1,128], index: 8, kind: input, shape index: {}]
  %s9 = inlined_call_operand.vmem [shape: f32[200,128], index: 9, kind: output, shape index: {}]
  %s10 = sld [smem:[#allocation0]]
  $region117: #{mlp_forward.1} parent=0
    _
  %s12 = ssub.s32 1, %s10
  %s13 = scalar_select 0, %s12, %s10
  $region1: #{mlp_forward.1} parent=0
    #allocation2 [shape = 'u8[131072]{0}', space=vmem, size = 0x20000, scoped, tag = 'output window, operand 0']
    loop: start=0, step=1, limit=4
    $region2: #{mlp_forward.1} parent=1 // loop_pre_header
      _
    $region3: #{mlp_forward.1} parent=1 // loop_header
      %s15 = sphi 0, %s19
      %p16 = scmp.ge.s32.totalorder %s15, 4
      %s25 = sphi 0, %s27
      %s28 = sphi 0, %s25
      %s29 = sphi 0, %s28
      %s45 = sphi 0, %s29
      %s49 = sphi 0, %s49
      %s51 = sphi 0, %s49
      %s52 = sphi 0, %s51
      %s66 = sphi 0, %s52
      %s70 = sphi 0, %s70
      %s72 = sphi 0, %s70
      %s73 = sphi 0, %s72
      %s87 = sphi 0, %s73
      %s91 = sphi 0, %s91
      %s93 = sphi 0, %s91
      %s94 = sphi 0, %s93
      %s108 = sphi 0, %s94
      %s112 = sphi 0, %s112
      %s114 = sphi 0, %s112
      %s115 = sphi 0, %s114
      %s129 = sphi 0, %s115
      %s133 = sphi 0, %s133
      %s135 = sphi 0, %s133
      %s136 = sphi 0, %s135
      %s150 = sphi 0, %s136
      %s154 = sphi 0, %s154
      %s156 = sphi 0, %s154
      %s157 = sphi 0, %s156
      %s171 = sphi 0, %s157
      %s175 = sphi 0, %s175
      %s177 = sphi 0, %s175
      %s178 = sphi 0, %s177
      %s192 = sphi 0, %s178
      %s196 = sphi 0, %s196
      %s198 = sphi 0, %s196
      %s199 = sphi 0, %s198
      %s213 = sphi 0, %s199
      %s219 = sphi 0, %s221
      %s222 = sphi 0, %s219
      %s223 = sphi 0, %s222
      %s239 = sphi 0, %s223
    $region4: #{mlp_forward.1} parent=1 // loop_header_branch
      %18 = sbr.rel (%p16) target = $region8
    $region5: #{mlp_forward.1} parent=1 // loop_body
      %s20 = ssub.s32 %s15, 1
      %s21 = ssub.s32 %s15, 2
      %s22 = sadd.s32 %s15, 1
      %s23 = ssub.s32 %s15, %s22
      %p24 = scmp.eq.s32.totalorder %s23, 0
      %s26 = sadd.s32 %s25, 1
      %s27 = scalar_select %p24, %s25, %s26
      %p30 = pneg %p24
      %p31 = scmp.eq.s32.totalorder %s15, 1
      %p32 = por %p30, %p31
      %p33 = scmp.ne.s32.totalorder %s25, %s28
      %p34 = scmp.eq.s32.totalorder %s15, 0
      %p35 = por %p33, %p34
      %p36 = scmp.ne.s32.totalorder %s25, %s28
      %p37 = scmp.eq.s32.totalorder %s20, 1
      %p38 = por %p36, %p37
      %p39 = scmp.ne.s32.totalorder %s28, %s29
      %p40 = scmp.eq.s32.totalorder %s20, 0
      %p41 = por %p39, %p40
      %p42 = scmp.ne.s32.totalorder %s28, %s29
      %p43 = scmp.eq.s32.totalorder %s21, 1
      %p44 = por %p42, %p43
      %p46 = scmp.ne.s32.totalorder %s29, %s45
      %p47 = scmp.eq.s32.totalorder %s21, 0
      %p48 = por %p46, %p47
      %s50 = sadd.s32 %s49, 1
      %p53 = scmp.eq.s32.totalorder %s15, 1
      %p54 = scmp.ne.s32.totalorder %s49, %s51
      %p55 = scmp.eq.s32.totalorder %s15, 0
      %p56 = por %p54, %p55
      %p57 = scmp.ne.s32.totalorder %s49, %s51
      %p58 = scmp.eq.s32.totalorder %s20, 1
      %p59 = por %p57, %p58
      %p60 = scmp.ne.s32.totalorder %s51, %s52
      %p61 = scmp.eq.s32.totalorder %s20, 0
      %p62 = por %p60, %p61
      %p63 = scmp.ne.s32.totalorder %s51, %s52
      %p64 = scmp.eq.s32.totalorder %s21, 1
      %p65 = por %p63, %p64
      %p67 = scmp.ne.s32.totalorder %s52, %s66
      %p68 = scmp.eq.s32.totalorder %s21, 0
      %p69 = por %p67, %p68
      %s71 = sadd.s32 %s70, 1
      %p74 = scmp.eq.s32.totalorder %s15, 1
      %p75 = scmp.ne.s32.totalorder %s70, %s72
      %p76 = scmp.eq.s32.totalorder %s15, 0
      %p77 = por %p75, %p76
      %p78 = scmp.ne.s32.totalorder %s70, %s72
      %p79 = scmp.eq.s32.totalorder %s20, 1
      %p80 = por %p78, %p79
      %p81 = scmp.ne.s32.totalorder %s72, %s73
      %p82 = scmp.eq.s32.totalorder %s20, 0
      %p83 = por %p81, %p82
      %p84 = scmp.ne.s32.totalorder %s72, %s73
      %p85 = scmp.eq.s32.totalorder %s21, 1
      %p86 = por %p84, %p85
      %p88 = scmp.ne.s32.totalorder %s73, %s87
      %p89 = scmp.eq.s32.totalorder %s21, 0
      %p90 = por %p88, %p89
      %s92 = sadd.s32 %s91, 1
      %p95 = scmp.eq.s32.totalorder %s15, 1
      %p96 = scmp.ne.s32.totalorder %s91, %s93
      %p97 = scmp.eq.s32.totalorder %s15, 0
      %p98 = por %p96, %p97
      %p99 = scmp.ne.s32.totalorder %s91, %s93
      %p100 = scmp.eq.s32.totalorder %s20, 1
      %p101 = por %p99, %p100
      %p102 = scmp.ne.s32.totalorder %s93, %s94
      %p103 = scmp.eq.s32.totalorder %s20, 0
      %p104 = por %p102, %p103
      %p105 = scmp.ne.s32.totalorder %s93, %s94
      %p106 = scmp.eq.s32.totalorder %s21, 1
      %p107 = por %p105, %p106
      %p109 = scmp.ne.s32.totalorder %s94, %s108
      %p110 = scmp.eq.s32.totalorder %s21, 0
      %p111 = por %p109, %p110
      %s113 = sadd.s32 %s112, 1
      %p116 = scmp.eq.s32.totalorder %s15, 1
      %p117 = scmp.ne.s32.totalorder %s112, %s114
      %p118 = scmp.eq.s32.totalorder %s15, 0
      %p119 = por %p117, %p118
      %p120 = scmp.ne.s32.totalorder %s112, %s114
      %p121 = scmp.eq.s32.totalorder %s20, 1
      %p122 = por %p120, %p121
      %p123 = scmp.ne.s32.totalorder %s114, %s115
      %p124 = scmp.eq.s32.totalorder %s20, 0
      %p125 = por %p123, %p124
      %p126 = scmp.ne.s32.totalorder %s114, %s115
      %p127 = scmp.eq.s32.totalorder %s21, 1
      %p128 = por %p126, %p127
      %p130 = scmp.ne.s32.totalorder %s115, %s129
      %p131 = scmp.eq.s32.totalorder %s21, 0
      %p132 = por %p130, %p131
      %s134 = sadd.s32 %s133, 1
      %p137 = scmp.eq.s32.totalorder %s15, 1
      %p138 = scmp.ne.s32.totalorder %s133, %s135
      %p139 = scmp.eq.s32.totalorder %s15, 0
      %p140 = por %p138, %p139
      %p141 = scmp.ne.s32.totalorder %s133, %s135
      %p142 = scmp.eq.s32.totalorder %s20, 1
      %p143 = por %p141, %p142
      %p144 = scmp.ne.s32.totalorder %s135, %s136
      %p145 = scmp.eq.s32.totalorder %s20, 0
      %p146 = por %p144, %p145
      %p147 = scmp.ne.s32.totalorder %s135, %s136
      %p148 = scmp.eq.s32.totalorder %s21, 1
      %p149 = por %p147, %p148
      %p151 = scmp.ne.s32.totalorder %s136, %s150
      %p152 = scmp.eq.s32.totalorder %s21, 0
      %p153 = por %p151, %p152
      %s155 = sadd.s32 %s154, 1
      %p158 = scmp.eq.s32.totalorder %s15, 1
      %p159 = scmp.ne.s32.totalorder %s154, %s156
      %p160 = scmp.eq.s32.totalorder %s15, 0
      %p161 = por %p159, %p160
      %p162 = scmp.ne.s32.totalorder %s154, %s156
      %p163 = scmp.eq.s32.totalorder %s20, 1
      %p164 = por %p162, %p163
      %p165 = scmp.ne.s32.totalorder %s156, %s157
      %p166 = scmp.eq.s32.totalorder %s20, 0
      %p167 = por %p165, %p166
      %p168 = scmp.ne.s32.totalorder %s156, %s157
      %p169 = scmp.eq.s32.totalorder %s21, 1
      %p170 = por %p168, %p169
      %p172 = scmp.ne.s32.totalorder %s157, %s171
      %p173 = scmp.eq.s32.totalorder %s21, 0
      %p174 = por %p172, %p173
      %s176 = sadd.s32 %s175, 1
      %p179 = scmp.eq.s32.totalorder %s15, 1
      %p180 = scmp.ne.s32.totalorder %s175, %s177
      %p181 = scmp.eq.s32.totalorder %s15, 0
      %p182 = por %p180, %p181
      %p183 = scmp.ne.s32.totalorder %s175, %s177
      %p184 = scmp.eq.s32.totalorder %s20, 1
      %p185 = por %p183, %p184
      %p186 = scmp.ne.s32.totalorder %s177, %s178
      %p187 = scmp.eq.s32.totalorder %s20, 0
      %p188 = por %p186, %p187
      %p189 = scmp.ne.s32.totalorder %s177, %s178
      %p190 = scmp.eq.s32.totalorder %s21, 1
      %p191 = por %p189, %p190
      %p193 = scmp.ne.s32.totalorder %s178, %s192
      %p194 = scmp.eq.s32.totalorder %s21, 0
      %p195 = por %p193, %p194
      %s197 = sadd.s32 %s196, 1
      %p200 = scmp.eq.s32.totalorder %s15, 1
      %p201 = scmp.ne.s32.totalorder %s196, %s198
      %p202 = scmp.eq.s32.totalorder %s15, 0
      %p203 = por %p201, %p202
      %p204 = scmp.ne.s32.totalorder %s196, %s198
      %p205 = scmp.eq.s32.totalorder %s20, 1
      %p206 = por %p204, %p205
      %p207 = scmp.ne.s32.totalorder %s198, %s199
      %p208 = scmp.eq.s32.totalorder %s20, 0
      %p209 = por %p207, %p208
      %p210 = scmp.ne.s32.totalorder %s198, %s199
      %p211 = scmp.eq.s32.totalorder %s21, 1
      %p212 = por %p210, %p211
      %p214 = scmp.ne.s32.totalorder %s199, %s213
      %p215 = scmp.eq.s32.totalorder %s21, 0
      %p216 = por %p214, %p215
      %s217 = ssub.s32 %s15, %s22
      %p218 = scmp.eq.s32.totalorder %s217, 0
      %s220 = sadd.s32 %s219, 1
      %s221 = scalar_select %p218, %s219, %s220
      %p224 = pneg %p218
      %p225 = scmp.eq.s32.totalorder %s15, 1
      %p226 = por %p224, %p225
      %p227 = scmp.ne.s32.totalorder %s219, %s222
      %p228 = scmp.eq.s32.totalorder %s15, 0
      %p229 = por %p227, %p228
      %p230 = scmp.ne.s32.totalorder %s219, %s222
      %p231 = scmp.eq.s32.totalorder %s20, 1
      %p232 = por %p230, %p231
      %p233 = scmp.ne.s32.totalorder %s222, %s223
      %p234 = scmp.eq.s32.totalorder %s20, 0
      %p235 = por %p233, %p234
      %p236 = scmp.ne.s32.totalorder %s222, %s223
      %p237 = scmp.eq.s32.totalorder %s21, 1
      %p238 = por %p236, %p237
      %p240 = scmp.ne.s32.totalorder %s223, %s239
      %p241 = scmp.eq.s32.totalorder %s21, 0
      %p242 = por %p240, %p241
      %p243 = scmp.le.s32.totalorder 1, %s15
      %p244 = scmp.lt.s32.totalorder %s15, 3
      %p245 = pnand %p243, %p244
      %p246 = pneg %p245
      // Predicated region
      $region9: #{mlp_forward.1} parent=5 // pred_check
        _
      $region10: #{mlp_forward.1} parent=5 // pred_check_branch
        %248 = sbr.rel (%p245) target = $region12
      $region11: #{mlp_forward.1} parent=5 // pred_region
        %s249 = ssub.s32 %s15, 1
        // Predicated region
        $region13: #{mlp_forward.1} parent=11 // pred_check
          %p250 = pneg %p62
        $region14: #{mlp_forward.1} parent=11 // pred_check_branch
          %252 = sbr.rel (%p250) target = $region16
        $region15: #{mlp_forward.1} parent=11 // pred_region
          _
        $region16: #{mlp_forward.1} parent=11 // pred_fallthru
          _
        // Predicated region
        $region17: #{mlp_forward.1} parent=11 // pred_check
          %p253 = pneg %p83
        $region18: #{mlp_forward.1} parent=11 // pred_check_branch
          %255 = sbr.rel (%p253) target = $region20
        $region19: #{mlp_forward.1} parent=11 // pred_region
          _
        $region20: #{mlp_forward.1} parent=11 // pred_fallthru
          _
        // Predicated region
        $region21: #{mlp_forward.1} parent=11 // pred_check
          %p256 = pneg %p104
        $region22: #{mlp_forward.1} parent=11 // pred_check_branch
          %258 = sbr.rel (%p256) target = $region24
        $region23: #{mlp_forward.1} parent=11 // pred_region
          _
        $region24: #{mlp_forward.1} parent=11 // pred_fallthru
          _
        // Predicated region
        $region25: #{mlp_forward.1} parent=11 // pred_check
          %p259 = pneg %p125
        $region26: #{mlp_forward.1} parent=11 // pred_check_branch
          %261 = sbr.rel (%p259) target = $region28
        $region27: #{mlp_forward.1} parent=11 // pred_region
          _
        $region28: #{mlp_forward.1} parent=11 // pred_fallthru
          _
        // Predicated region
        $region29: #{mlp_forward.1} parent=11 // pred_check
          %p262 = pneg %p146
        $region30: #{mlp_forward.1} parent=11 // pred_check_branch
          %264 = sbr.rel (%p262) target = $region32
        $region31: #{mlp_forward.1} parent=11 // pred_region
          _
        $region32: #{mlp_forward.1} parent=11 // pred_fallthru
          _
        // Predicated region
        $region33: #{mlp_forward.1} parent=11 // pred_check
          %p265 = pneg %p167
        $region34: #{mlp_forward.1} parent=11 // pred_check_branch
          %267 = sbr.rel (%p265) target = $region36
        $region35: #{mlp_forward.1} parent=11 // pred_region
          _
        $region36: #{mlp_forward.1} parent=11 // pred_fallthru
          _
        // Predicated region
        $region37: #{mlp_forward.1} parent=11 // pred_check
          %p268 = pneg %p188
        $region38: #{mlp_forward.1} parent=11 // pred_check_branch
          %270 = sbr.rel (%p268) target = $region40
        $region39: #{mlp_forward.1} parent=11 // pred_region
          _
        $region40: #{mlp_forward.1} parent=11 // pred_fallthru
          _
        // Predicated region
        $region41: #{mlp_forward.1} parent=11 // pred_check
          %p271 = pneg %p209
        $region42: #{mlp_forward.1} parent=11 // pred_check_branch
          %273 = sbr.rel (%p271) target = $region44
        $region43: #{mlp_forward.1} parent=11 // pred_region
          _
        $region44: #{mlp_forward.1} parent=11 // pred_fallthru
          _
      $region12: #{mlp_forward.1} parent=5 // pred_fallthru
        _
      %p274 = scmp.lt.s32.totalorder %s15, 2
      // Predicated region
      $region45: #{mlp_forward.1} parent=5 // pred_check
        %p275 = pneg %p274
      $region46: #{mlp_forward.1} parent=5 // pred_check_branch
        %277 = sbr.rel (%p275) target = $region48
      $region47: #{mlp_forward.1} parent=5 // pred_region
        // Predicated region
        $region49: #{mlp_forward.1} parent=47 // pred_check
          %p278 = pneg %p35
        $region50: #{mlp_forward.1} parent=47 // pred_check_branch
          %280 = sbr.rel (%p278) target = $region52
        $region51: #{mlp_forward.1} parent=47 // pred_region
          %s281 = smul.u32 16, %s15
          %s282 = ssub.s32 25, %s281
          %p283 = scmp.lt.s32.totalorder %s282, 16
          %s284 = scalar_select %p283, %s282, 16
          %s285 = smul.u32 8, %s284
          %p286 = scmp.lt.s32.totalorder %s281, 24
          %s287 = scalar_select %p286, %s281, 24
          %s288 = smul.addr %s287, 8
          %s289 = scalar_lea.vmem %s0, %s288
          %s290 = smul.u32 16, %s15
          %s291 = ssub.s32 25, %s290
          %p292 = scmp.lt.s32.totalorder %s291, 16
          %s293 = scalar_select %p292, %s291, 16
          %s294 = smul.u32 8, %s293
        $region52: #{mlp_forward.1} parent=47 // pred_fallthru
          _
      $region48: #{mlp_forward.1} parent=5 // pred_fallthru
        _
      %p295 = scmp.le.s32.totalorder 1, %s15
      %p296 = scmp.lt.s32.totalorder %s15, 3
      %p297 = pnand %p295, %p296
      %p298 = pneg %p297
      // Predicated region
      $region53: #{mlp_forward.1} parent=5 // pred_check
        _
      $region54: #{mlp_forward.1} parent=5 // pred_check_branch
        %300 = sbr.rel (%p297) target = $region56
      $region55: #{mlp_forward.1} parent=5 // pred_region
        %s301 = ssub.s32 %s15, 1
        %s302 = smul.u32 16, %s20
        %s303 = ssub.s32 25, %s302
        %p304 = scmp.lt.s32.totalorder %s303, 16
        %s305 = scalar_select %p304, %s303, 16
        %s306 = smul.u32 8, %s305
        %p307 = scmp.lt.s32.totalorder %s302, 24
        %s308 = scalar_select %p307, %s302, 24
        %s309 = smul.addr %s308, 8
        %s310 = scalar_lea.vmem %s0, %s309
        %p311 = pneg %p41
        %p312 = pneg %p38
        %p313 = pneg %p62
        %p314 = pneg %p59
        %p315 = pneg %p83
        %p316 = pneg %p80
        %p317 = pneg %p104
        %p318 = pneg %p101
        %p319 = pneg %p125
        %p320 = pneg %p122
        %p321 = pneg %p146
        %p322 = pneg %p143
        %p323 = pneg %p167
        %p324 = pneg %p164
        %p325 = pneg %p188
        %p326 = pneg %p185
        %p327 = pneg %p209
        %p328 = pneg %p206
        %p329 = pneg %p235
        %p330 = pneg %p232
        %s331 = sand.u32 %s222, 1
        %s332 = sand.u32 %s222, 1
        %s333 = smul.addr %s332, 128
        %s334 = scalar_lea.vmem [#allocation2], %s333
        %s335 = smul.u32 16, %s20
        %s336 = ssub.s32 25, %s335
        %p337 = scmp.lt.s32.totalorder %s336, 16
        %s338 = scalar_select %p337, %s336, 16
        %s339 = smul.u32 8, %s338
        %p340 = scmp.lt.s32.totalorder %s335, 24
        %s341 = scalar_select %p340, %s335, 24
        %s342 = smul.addr %s341, 8
        %s343 = scalar_lea.vmem %s0, %s342
        %s344 = smul.u32 16, %s20
        %s345 = ssub.s32 25, %s344
        %p346 = scmp.lt.s32.totalorder %s345, 16
        %s347 = scalar_select %p346, %s345, 16
        %s348 = smul.u32 8, %s347
        %s349 = smul.u32 16, %s20
        %s350 = ssub.s32 25, %s349
        %p351 = scmp.lt.s32.totalorder %s350, 16
        %s352 = scalar_select %p351, %s350, 16
        %s353 = smul.u32 8, %s352
        %v355 = vld [vmem:[%s343] sm:$0xff]
        %v356 = vld [vmem:[%s343 + $0x8] sm:$0xff]
        %v357 = vld [vmem:[%s343 + $0x10] sm:$0xff]
        %v358 = vld [vmem:[%s343 + $0x18] sm:$0xff]
        %v359 = vld [vmem:[%s343 + $0x20] sm:$0xff]
        %v360 = vld [vmem:[%s343 + $0x28] sm:$0xff]
        %v361 = vld [vmem:[%s343 + $0x30] sm:$0xff]
        %v362 = vld [vmem:[%s343 + $0x38] sm:$0xff]
        %v363 = vld [vmem:[%s343 + $0x40] sm:$0xff]
        %v364 = vld [vmem:[%s343 + $0x48] sm:$0xff]
        %v365 = vld [vmem:[%s343 + $0x50] sm:$0xff]
        %v366 = vld [vmem:[%s343 + $0x58] sm:$0xff]
        %v367 = vld [vmem:[%s343 + $0x60] sm:$0xff]
        %v368 = vld [vmem:[%s343 + $0x68] sm:$0xff]
        %v369 = vld [vmem:[%s343 + $0x70] sm:$0xff]
        %v370 = vld [vmem:[%s343 + $0x78] sm:$0xff]
        %v371 = vpack.c.bf16 %v356, %v355
        %v372 = vpack.c.bf16 %v358, %v357
        %v373 = vpack.c.bf16 %v360, %v359
        %v374 = vpack.c.bf16 %v362, %v361
        %v375 = vpack.c.bf16 %v364, %v363
        %v376 = vpack.c.bf16 %v366, %v365
        %v377 = vpack.c.bf16 %v368, %v367
        %v378 = vpack.c.bf16 %v370, %v369
        %v379 = vld [vmem:[%s1] sm:$0xf]
        %v380 = vld [vmem:[%s1 + $0x4] sm:$0xf]
        %v381 = vld [vmem:[%s1 + $0x8] sm:$0xf]
        %v382 = vld [vmem:[%s1 + $0xc] sm:$0xf]
        %v383 = vld [vmem:[%s2] sm:$0x1]
        %v385 = vperm.slane %v383, 0
        %v391 = vunpack.c.l.b16 %v379
        %v392 = vunpack.c.l.b16 %v380
        %v393 = vunpack.c.l.b16 %v381
        %v394 = vunpack.c.l.b16 %v382
        %v395 = vpack.c.b16 %v392, %v391
        %v396 = vpack.c.b16 %v394, %v393
        %vm399 = vcmask 261120
        %v401 = vsel %vm399, %v371, 0
        %v404 = vsel %vm399, %v372, 0
        %v407 = vsel %vm399, %v373, 0
        %v410 = vsel %vm399, %v374, 0
        %v413 = vsel %vm399, %v375, 0
        %v416 = vsel %vm399, %v376, 0
        %v419 = vsel %vm399, %v377, 0
        %v422 = vsel %vm399, %v378, 0
        %424 = vmatpush.bf16.msra.mxu0 0
        %425 = vmatpush.bf16.msra.mxu0 0
        %426 = vmatpush.bf16.msra.mxu0 0
        %427 = vmatpush.bf16.msra.mxu0 0
        %428 = vmatpush.bf16.msra.mxu0 0
        %429 = vmatpush.bf16.msra.mxu0 0
        %430 = vmatpush.bf16.msra.mxu0 %v396
        %431 = vmatpush.bf16.msra.mxu0 %v395
        %432 = vmatmul.bf16.gmra.mxu0 %v401
        %v433 = vpop.f32.mrf.mxu0
        %v434 = vadd.f32 %v385, %v433
        %v435 = vpop.f32.mrf.mxu0
        %v436 = vadd.f32 %v385, %v435
        %437 = vmatmul.bf16.gmra.mxu0 %v404
        %v438 = vpop.f32.mrf.mxu0
        %v439 = vadd.f32 %v385, %v438
        %v440 = vpop.f32.mrf.mxu0
        %v441 = vadd.f32 %v385, %v440
        %442 = vmatmul.bf16.gmra.mxu0 %v407
        %v443 = vpop.f32.mrf.mxu0
        %v444 = vadd.f32 %v385, %v443
        %v445 = vpop.f32.mrf.mxu0
        %v446 = vadd.f32 %v385, %v445
        %447 = vmatmul.bf16.gmra.mxu0 %v410
        %v448 = vpop.f32.mrf.mxu0
        %v449 = vadd.f32 %v385, %v448
        %v450 = vpop.f32.mrf.mxu0
        %v451 = vadd.f32 %v385, %v450
        %452 = vmatmul.bf16.gmra.mxu0 %v413
        %v453 = vpop.f32.mrf.mxu0
        %v454 = vadd.f32 %v385, %v453
        %v455 = vpop.f32.mrf.mxu0
        %v456 = vadd.f32 %v385, %v455
        %457 = vmatmul.bf16.gmra.mxu0 %v416
        %v458 = vpop.f32.mrf.mxu0
        %v459 = vadd.f32 %v385, %v458
        %v460 = vpop.f32.mrf.mxu0
        %v461 = vadd.f32 %v385, %v460
        %462 = vmatmul.bf16.gmra.mxu0 %v419
        %v463 = vpop.f32.mrf.mxu0
        %v464 = vadd.f32 %v385, %v463
        %v465 = vpop.f32.mrf.mxu0
        %v466 = vadd.f32 %v385, %v465
        %467 = vmatmul.bf16.gmra.mxu0 %v422
        %v468 = vpop.f32.mrf.mxu0
        %v469 = vadd.f32 %v385, %v468
        %v470 = vpop.f32.mrf.mxu0
        %v471 = vadd.f32 %v385, %v470
        %472 = vdwg.mxu0
        %v473 = vmax.f32 %v434, 0.0
        %v474 = vmax.f32 %v436, 0.0
        %v475 = vmax.f32 %v439, 0.0
        %v476 = vmax.f32 %v441, 0.0
        %v477 = vmax.f32 %v444, 0.0
        %v478 = vmax.f32 %v446, 0.0
        %v479 = vmax.f32 %v449, 0.0
        %v480 = vmax.f32 %v451, 0.0
        %v481 = vmax.f32 %v454, 0.0
        %v482 = vmax.f32 %v456, 0.0
        %v483 = vmax.f32 %v459, 0.0
        %v484 = vmax.f32 %v461, 0.0
        %v485 = vmax.f32 %v464, 0.0
        %v486 = vmax.f32 %v466, 0.0
        %v487 = vmax.f32 %v469, 0.0
        %v488 = vmax.f32 %v471, 0.0
        %v489 = vpack.c.bf16 %v474, %v473
        %v490 = vpack.c.bf16 %v476, %v475
        %v491 = vpack.c.bf16 %v478, %v477
        %v492 = vpack.c.bf16 %v480, %v479
        %v493 = vpack.c.bf16 %v482, %v481
        %v494 = vpack.c.bf16 %v484, %v483
        %v495 = vpack.c.bf16 %v486, %v485
        %v496 = vpack.c.bf16 %v488, %v487
        %v497 = vld [vmem:[%s3] sm:$0xf]
        %v498 = vld [vmem:[%s3 + $0x4] sm:$0xf]
        %v499 = vld [vmem:[%s3 + $0x8] sm:$0xf]
        %v500 = vld [vmem:[%s3 + $0xc] sm:$0xf]
        %v501 = vld [vmem:[%s3 + $0x10] sm:$0xf]
        %v502 = vld [vmem:[%s3 + $0x14] sm:$0xf]
        %v503 = vld [vmem:[%s3 + $0x18] sm:$0xf]
        %v504 = vld [vmem:[%s3 + $0x1c] sm:$0xf]
        %v505 = vld [vmem:[%s3 + $0x20] sm:$0xf]
        %v506 = vld [vmem:[%s3 + $0x24] sm:$0xf]
        %v507 = vld [vmem:[%s3 + $0x28] sm:$0xf]
        %v508 = vld [vmem:[%s3 + $0x2c] sm:$0xf]
        %v509 = vld [vmem:[%s3 + $0x30] sm:$0xf]
        %v510 = vld [vmem:[%s3 + $0x34] sm:$0xf]
        %v511 = vld [vmem:[%s3 + $0x38] sm:$0xf]
        %v512 = vld [vmem:[%s3 + $0x3c] sm:$0xf]
        %v513 = vld [vmem:[%s4] sm:$0x1]
        %v515 = vperm.slane %v513, 0
        %v533 = vunpack.c.l.b16 %v497
        %v534 = vunpack.c.l.b16 %v498
        %v535 = vunpack.c.l.b16 %v499
        %v536 = vunpack.c.l.b16 %v500
        %v537 = vunpack.c.l.b16 %v501
        %v538 = vunpack.c.l.b16 %v502
        %v539 = vunpack.c.l.b16 %v503
        %v540 = vunpack.c.l.b16 %v504
        %v541 = vunpack.c.l.b16 %v505
        %v542 = vunpack.c.l.b16 %v506
        %v543 = vunpack.c.l.b16 %v507
        %v544 = vunpack.c.l.b16 %v508
        %v545 = vunpack.c.l.b16 %v509
        %v546 = vunpack.c.l.b16 %v510
        %v547 = vunpack.c.l.b16 %v511
        %v548 = vunpack.c.l.b16 %v512
        %v549 = vpack.c.b16 %v534, %v533
        %v550 = vpack.c.b16 %v536, %v535
        %v551 = vpack.c.b16 %v538, %v537
        %v552 = vpack.c.b16 %v540, %v539
        %v553 = vpack.c.b16 %v542, %v541
        %v554 = vpack.c.b16 %v544, %v543
        %v555 = vpack.c.b16 %v546, %v545
        %v556 = vpack.c.b16 %v548, %v547
        %565 = vmatpush.bf16.msra.mxu0 %v556
        %566 = vmatpush.bf16.msra.mxu0 %v555
        %567 = vmatpush.bf16.msra.mxu0 %v554
        %568 = vmatpush.bf16.msra.mxu0 %v553
        %569 = vmatpush.bf16.msra.mxu0 %v552
        %570 = vmatpush.bf16.msra.mxu0 %v551
        %571 = vmatpush.bf16.msra.mxu0 %v550
        %572 = vmatpush.bf16.msra.mxu0 %v549
        %573 = vmatmul.bf16.gmra.mxu0 %v489
        %v574 = vpop.f32.mrf.mxu0
        %v575 = vadd.f32 %v515, %v574
        %v576 = vpop.f32.mrf.mxu0
        %v577 = vadd.f32 %v515, %v576
        %578 = vmatmul.bf16.gmra.mxu0 %v490
        %v579 = vpop.f32.mrf.mxu0
        %v580 = vadd.f32 %v515, %v579
        %v581 = vpop.f32.mrf.mxu0
        %v582 = vadd.f32 %v515, %v581
        %583 = vmatmul.bf16.gmra.mxu0 %v491
        %v584 = vpop.f32.mrf.mxu0
        %v585 = vadd.f32 %v515, %v584
        %v586 = vpop.f32.mrf.mxu0
        %v587 = vadd.f32 %v515, %v586
        %588 = vmatmul.bf16.gmra.mxu0 %v492
        %v589 = vpop.f32.mrf.mxu0
        %v590 = vadd.f32 %v515, %v589
        %v591 = vpop.f32.mrf.mxu0
        %v592 = vadd.f32 %v515, %v591
        %593 = vmatmul.bf16.gmra.mxu0 %v493
        %v594 = vpop.f32.mrf.mxu0
        %v595 = vadd.f32 %v515, %v594
        %v596 = vpop.f32.mrf.mxu0
        %v597 = vadd.f32 %v515, %v596
        %598 = vmatmul.bf16.gmra.mxu0 %v494
        %v599 = vpop.f32.mrf.mxu0
        %v600 = vadd.f32 %v515, %v599
        %v601 = vpop.f32.mrf.mxu0
        %v602 = vadd.f32 %v515, %v601
        %603 = vmatmul.bf16.gmra.mxu0 %v495
        %v604 = vpop.f32.mrf.mxu0
        %v605 = vadd.f32 %v515, %v604
        %v606 = vpop.f32.mrf.mxu0
        %v607 = vadd.f32 %v515, %v606
        %608 = vmatmul.bf16.gmra.mxu0 %v496
        %v609 = vpop.f32.mrf.mxu0
        %v610 = vadd.f32 %v515, %v609
        %v611 = vpop.f32.mrf.mxu0
        %v612 = vadd.f32 %v515, %v611
        %613 = vdwg.mxu0
        %v614 = vmax.f32 %v575, 0.0
        %v615 = vmax.f32 %v577, 0.0
        %v616 = vmax.f32 %v580, 0.0
        %v617 = vmax.f32 %v582, 0.0
        %v618 = vmax.f32 %v585, 0.0
        %v619 = vmax.f32 %v587, 0.0
        %v620 = vmax.f32 %v590, 0.0
        %v621 = vmax.f32 %v592, 0.0
        %v622 = vmax.f32 %v595, 0.0
        %v623 = vmax.f32 %v597, 0.0
        %v624 = vmax.f32 %v600, 0.0
        %v625 = vmax.f32 %v602, 0.0
        %v626 = vmax.f32 %v605, 0.0
        %v627 = vmax.f32 %v607, 0.0
        %v628 = vmax.f32 %v610, 0.0
        %v629 = vmax.f32 %v612, 0.0
        %v630 = vpack.c.bf16 %v615, %v614
        %v631 = vpack.c.bf16 %v617, %v616
        %v632 = vpack.c.bf16 %v619, %v618
        %v633 = vpack.c.bf16 %v621, %v620
        %v634 = vpack.c.bf16 %v623, %v622
        %v635 = vpack.c.bf16 %v625, %v624
        %v636 = vpack.c.bf16 %v627, %v626
        %v637 = vpack.c.bf16 %v629, %v628
        %v638 = vld [vmem:[%s5] sm:$0xf]
        %v639 = vld [vmem:[%s5 + $0x4] sm:$0xf]
        %v640 = vld [vmem:[%s5 + $0x8] sm:$0xf]
        %v641 = vld [vmem:[%s5 + $0xc] sm:$0xf]
        %v642 = vld [vmem:[%s5 + $0x10] sm:$0xf]
        %v643 = vld [vmem:[%s5 + $0x14] sm:$0xf]
        %v644 = vld [vmem:[%s5 + $0x18] sm:$0xf]
        %v645 = vld [vmem:[%s5 + $0x1c] sm:$0xf]
        %v646 = vld [vmem:[%s5 + $0x20] sm:$0xf]
        %v647 = vld [vmem:[%s5 + $0x24] sm:$0xf]
        %v648 = vld [vmem:[%s5 + $0x28] sm:$0xf]
        %v649 = vld [vmem:[%s5 + $0x2c] sm:$0xf]
        %v650 = vld [vmem:[%s5 + $0x30] sm:$0xf]
        %v651 = vld [vmem:[%s5 + $0x34] sm:$0xf]
        %v652 = vld [vmem:[%s5 + $0x38] sm:$0xf]
        %v653 = vld [vmem:[%s5 + $0x3c] sm:$0xf]
        %v654 = vld [vmem:[%s6] sm:$0x1]
        %v656 = vperm.slane %v654, 0
        %v674 = vunpack.c.l.b16 %v638
        %v675 = vunpack.c.l.b16 %v639
        %v676 = vunpack.c.l.b16 %v640
        %v677 = vunpack.c.l.b16 %v641
        %v678 = vunpack.c.l.b16 %v642
        %v679 = vunpack.c.l.b16 %v643
        %v680 = vunpack.c.l.b16 %v644
        %v681 = vunpack.c.l.b16 %v645
        %v682 = vunpack.c.l.b16 %v646
        %v683 = vunpack.c.l.b16 %v647
        %v684 = vunpack.c.l.b16 %v648
        %v685 = vunpack.c.l.b16 %v649
        %v686 = vunpack.c.l.b16 %v650
        %v687 = vunpack.c.l.b16 %v651
        %v688 = vunpack.c.l.b16 %v652
        %v689 = vunpack.c.l.b16 %v653
        %v690 = vpack.c.b16 %v675, %v674
        %v691 = vpack.c.b16 %v677, %v676
        %v692 = vpack.c.b16 %v679, %v678
        %v693 = vpack.c.b16 %v681, %v680
        %v694 = vpack.c.b16 %v683, %v682
        %v695 = vpack.c.b16 %v685, %v684
        %v696 = vpack.c.b16 %v687, %v686
        %v697 = vpack.c.b16 %v689, %v688
        %706 = vmatpush.bf16.msra.mxu0 %v697
        %707 = vmatpush.bf16.msra.mxu0 %v696
        %708 = vmatpush.bf16.msra.mxu0 %v695
        %709 = vmatpush.bf16.msra.mxu0 %v694
        %710 = vmatpush.bf16.msra.mxu0 %v693
        %711 = vmatpush.bf16.msra.mxu0 %v692
        %712 = vmatpush.bf16.msra.mxu0 %v691
        %713 = vmatpush.bf16.msra.mxu0 %v690
        %714 = vmatmul.bf16.gmra.mxu0 %v630
        %v715 = vpop.f32.mrf.mxu0
        %v716 = vadd.f32 %v656, %v715
        %v717 = vpop.f32.mrf.mxu0
        %v718 = vadd.f32 %v656, %v717
        %719 = vmatmul.bf16.gmra.mxu0 %v631
        %v720 = vpop.f32.mrf.mxu0
        %v721 = vadd.f32 %v656, %v720
        %v722 = vpop.f32.mrf.mxu0
        %v723 = vadd.f32 %v656, %v722
        %724 = vmatmul.bf16.gmra.mxu0 %v632
        %v725 = vpop.f32.mrf.mxu0
        %v726 = vadd.f32 %v656, %v725
        %v727 = vpop.f32.mrf.mxu0
        %v728 = vadd.f32 %v656, %v727
        %729 = vmatmul.bf16.gmra.mxu0 %v633
        %v730 = vpop.f32.mrf.mxu0
        %v731 = vadd.f32 %v656, %v730
        %v732 = vpop.f32.mrf.mxu0
        %v733 = vadd.f32 %v656, %v732
        %734 = vmatmul.bf16.gmra.mxu0 %v634
        %v735 = vpop.f32.mrf.mxu0
        %v736 = vadd.f32 %v656, %v735
        %v737 = vpop.f32.mrf.mxu0
        %v738 = vadd.f32 %v656, %v737
        %739 = vmatmul.bf16.gmra.mxu0 %v635
        %v740 = vpop.f32.mrf.mxu0
        %v741 = vadd.f32 %v656, %v740
        %v742 = vpop.f32.mrf.mxu0
        %v743 = vadd.f32 %v656, %v742
        %744 = vmatmul.bf16.gmra.mxu0 %v636
        %v745 = vpop.f32.mrf.mxu0
        %v746 = vadd.f32 %v656, %v745
        %v747 = vpop.f32.mrf.mxu0
        %v748 = vadd.f32 %v656, %v747
        %749 = vmatmul.bf16.gmra.mxu0 %v637
        %v750 = vpop.f32.mrf.mxu0
        %v751 = vadd.f32 %v656, %v750
        %v752 = vpop.f32.mrf.mxu0
        %v753 = vadd.f32 %v656, %v752
        %754 = vdwg.mxu0
        %v755 = vmax.f32 %v716, 0.0
        %v756 = vmax.f32 %v718, 0.0
        %v757 = vmax.f32 %v721, 0.0
        %v758 = vmax.f32 %v723, 0.0
        %v759 = vmax.f32 %v726, 0.0
        %v760 = vmax.f32 %v728, 0.0
        %v761 = vmax.f32 %v731, 0.0
        %v762 = vmax.f32 %v733, 0.0
        %v763 = vmax.f32 %v736, 0.0
        %v764 = vmax.f32 %v738, 0.0
        %v765 = vmax.f32 %v741, 0.0
        %v766 = vmax.f32 %v743, 0.0
        %v767 = vmax.f32 %v746, 0.0
        %v768 = vmax.f32 %v748, 0.0
        %v769 = vmax.f32 %v751, 0.0
        %v770 = vmax.f32 %v753, 0.0
        %v771 = vpack.c.bf16 %v756, %v755
        %v772 = vpack.c.bf16 %v758, %v757
        %v773 = vpack.c.bf16 %v760, %v759
        %v774 = vpack.c.bf16 %v762, %v761
        %v775 = vpack.c.bf16 %v764, %v763
        %v776 = vpack.c.bf16 %v766, %v765
        %v777 = vpack.c.bf16 %v768, %v767
        %v778 = vpack.c.bf16 %v770, %v769
        %v779 = vld [vmem:[%s7] sm:$0xf]
        %v780 = vld [vmem:[%s7 + $0x4] sm:$0xf]
        %v781 = vld [vmem:[%s7 + $0x8] sm:$0xf]
        %v782 = vld [vmem:[%s7 + $0xc] sm:$0xf]
        %v783 = vld [vmem:[%s7 + $0x10] sm:$0xf]
        %v784 = vld [vmem:[%s7 + $0x14] sm:$0xf]
        %v785 = vld [vmem:[%s7 + $0x18] sm:$0xf]
        %v786 = vld [vmem:[%s7 + $0x1c] sm:$0xf]
        %v787 = vld [vmem:[%s7 + $0x20] sm:$0xf]
        %v788 = vld [vmem:[%s7 + $0x24] sm:$0xf]
        %v789 = vld [vmem:[%s7 + $0x28] sm:$0xf]
        %v790 = vld [vmem:[%s7 + $0x2c] sm:$0xf]
        %v791 = vld [vmem:[%s7 + $0x30] sm:$0xf]
        %v792 = vld [vmem:[%s7 + $0x34] sm:$0xf]
        %v793 = vld [vmem:[%s7 + $0x38] sm:$0xf]
        %v794 = vld [vmem:[%s7 + $0x3c] sm:$0xf]
        %v795 = vld [vmem:[%s8] sm:$0x1]
        %v797 = vperm.slane %v795, 0
        %v815 = vunpack.c.l.b16 %v779
        %v816 = vunpack.c.l.b16 %v780
        %v817 = vunpack.c.l.b16 %v781
        %v818 = vunpack.c.l.b16 %v782
        %v819 = vunpack.c.l.b16 %v783
        %v820 = vunpack.c.l.b16 %v784
        %v821 = vunpack.c.l.b16 %v785
        %v822 = vunpack.c.l.b16 %v786
        %v823 = vunpack.c.l.b16 %v787
        %v824 = vunpack.c.l.b16 %v788
        %v825 = vunpack.c.l.b16 %v789
        %v826 = vunpack.c.l.b16 %v790
        %v827 = vunpack.c.l.b16 %v791
        %v828 = vunpack.c.l.b16 %v792
        %v829 = vunpack.c.l.b16 %v793
        %v830 = vunpack.c.l.b16 %v794
        %v831 = vpack.c.b16 %v816, %v815
        %v832 = vpack.c.b16 %v818, %v817
        %v833 = vpack.c.b16 %v820, %v819
        %v834 = vpack.c.b16 %v822, %v821
        %v835 = vpack.c.b16 %v824, %v823
        %v836 = vpack.c.b16 %v826, %v825
        %v837 = vpack.c.b16 %v828, %v827
        %v838 = vpack.c.b16 %v830, %v829
        %847 = vmatpush.bf16.msra.mxu0 %v838
        %848 = vmatpush.bf16.msra.mxu0 %v837
        %849 = vmatpush.bf16.msra.mxu0 %v836
        %850 = vmatpush.bf16.msra.mxu0 %v835
        %851 = vmatpush.bf16.msra.mxu0 %v834
        %852 = vmatpush.bf16.msra.mxu0 %v833
        %853 = vmatpush.bf16.msra.mxu0 %v832
        %854 = vmatpush.bf16.msra.mxu0 %v831
        %855 = vmatmul.bf16.gmra.mxu0 %v771
        %v856 = vpop.f32.mrf.mxu0
        %v857 = vadd.f32 %v797, %v856
        %v858 = vpop.f32.mrf.mxu0
        %v859 = vadd.f32 %v797, %v858
        %860 = vmatmul.bf16.gmra.mxu0 %v772
        %v861 = vpop.f32.mrf.mxu0
        %v862 = vadd.f32 %v797, %v861
        %v863 = vpop.f32.mrf.mxu0
        %v864 = vadd.f32 %v797, %v863
        %865 = vmatmul.bf16.gmra.mxu0 %v773
        %v866 = vpop.f32.mrf.mxu0
        %v867 = vadd.f32 %v797, %v866
        %v868 = vpop.f32.mrf.mxu0
        %v869 = vadd.f32 %v797, %v868
        %870 = vmatmul.bf16.gmra.mxu0 %v774
        %v871 = vpop.f32.mrf.mxu0
        %v872 = vadd.f32 %v797, %v871
        %v873 = vpop.f32.mrf.mxu0
        %v874 = vadd.f32 %v797, %v873
        %875 = vmatmul.bf16.gmra.mxu0 %v775
        %v876 = vpop.f32.mrf.mxu0
        %v877 = vadd.f32 %v797, %v876
        %v878 = vpop.f32.mrf.mxu0
        %v879 = vadd.f32 %v797, %v878
        %880 = vmatmul.bf16.gmra.mxu0 %v776
        %v881 = vpop.f32.mrf.mxu0
        %v882 = vadd.f32 %v797, %v881
        %v883 = vpop.f32.mrf.mxu0
        %v884 = vadd.f32 %v797, %v883
        %885 = vmatmul.bf16.gmra.mxu0 %v777
        %v886 = vpop.f32.mrf.mxu0
        %v887 = vadd.f32 %v797, %v886
        %v888 = vpop.f32.mrf.mxu0
        %v889 = vadd.f32 %v797, %v888
        %890 = vmatmul.bf16.gmra.mxu0 %v778
        %v891 = vpop.f32.mrf.mxu0
        %v892 = vadd.f32 %v797, %v891
        %v893 = vpop.f32.mrf.mxu0
        %v894 = vadd.f32 %v797, %v893
        %895 = vdwg.mxu0
        %896 = vst [vmem:[%s334] sm:$0xff] %v857
        %897 = vst [vmem:[%s334 + $0x8] sm:$0xff] %v859
        %898 = vst [vmem:[%s334 + $0x10] sm:$0xff] %v862
        %899 = vst [vmem:[%s334 + $0x18] sm:$0xff] %v864
        %900 = vst [vmem:[%s334 + $0x20] sm:$0xff] %v867
        %901 = vst [vmem:[%s334 + $0x28] sm:$0xff] %v869
        %902 = vst [vmem:[%s334 + $0x30] sm:$0xff] %v872
        %903 = vst [vmem:[%s334 + $0x38] sm:$0xff] %v874
        %904 = vst [vmem:[%s334 + $0x40] sm:$0xff] %v877
        %905 = vst [vmem:[%s334 + $0x48] sm:$0xff] %v879
        %906 = vst [vmem:[%s334 + $0x50] sm:$0xff] %v882
        %907 = vst [vmem:[%s334 + $0x58] sm:$0xff] %v884
        %908 = vst [vmem:[%s334 + $0x60] sm:$0xff] %v887
        %909 = vst [vmem:[%s334 + $0x68] sm:$0xff] %v889
        %910 = vst [vmem:[%s334 + $0x70] sm:$0xff] %v892
        %911 = vst [vmem:[%s334 + $0x78] sm:$0xff] %v894
        %s912 = sand.u32 %s222, 1
        %s913 = sand.u32 %s222, 1
        %s914 = smul.addr %s913, 128
        %s915 = scalar_lea.vmem [#allocation2], %s914
        // Predicated region
        $region57: #{mlp_forward.1} parent=55 // pred_check
          %p916 = pneg %p232
        $region58: #{mlp_forward.1} parent=55 // pred_check_branch
          %918 = sbr.rel (%p916) target = $region60
        $region59: #{mlp_forward.1} parent=55 // pred_region
          %s919 = smul.u32 16, %s20
          %s920 = ssub.s32 25, %s919
          %p921 = scmp.lt.s32.totalorder %s920, 16
          %s922 = scalar_select %p921, %s920, 16
          %s923 = smul.u32 8, %s922
          %p924 = scmp.ne.s32.totalorder 0, %s923
          %s925 = smul.addr %s919, 8
          %s926 = scalar_lea.vmem %s9, %s925
          // Predicated region
          $region61: #{mlp_forward.1} parent=59 // pred_check
            %p927 = pneg %p924
          $region62: #{mlp_forward.1} parent=59 // pred_check_branch
            %929 = sbr.rel (%p927) target = $region64
          $region63: #{mlp_forward.1} parent=59 // pred_region
            // Predicated region
            $region65: #{mlp_forward.1} parent=63 // pred_check
              _
            $region66: #{mlp_forward.1} parent=63 // pred_check_branch
              %931 = sbr.rel (0) target = $region68
            $region67: #{mlp_forward.1} parent=63 // pred_region
              // Predicated region
              $region87: #{mlp_forward.1} parent=67 // pred_check
                _
              $region88: #{mlp_forward.1} parent=67 // pred_check_branch
                %1011 = sbr.rel (0) target = $region90
              $region89: #{mlp_forward.1} parent=67 // pred_region
                %s1012 = sshrl.u32 %s922, 4
                // While loop
                $region91: #{mlp_forward.1} parent=89 // loop_pre_header
                  _
                $region92: #{mlp_forward.1} parent=89 // loop_header
                  %s1014 = sphi 0, %s1016
                  %p1015 = scmp.ge.s32.totalorder %s1014, %s1012
                  %s1019 = sphi 0, %s1056
                  %s1020 = sphi %s915, %s1059
                  %s1021 = sphi %s926, %s1060
                $region93: #{mlp_forward.1} parent=89 // loop_header_branch
                  %1018 = sbr.rel (%p1015) target = $region97
                $region94: #{mlp_forward.1} parent=89 // loop_body
                  %v1022 = vld [vmem:[%s1020] sm:$0xff]
                  %1023 = vst [vmem:[%s1021] sm:$0xff] %v1022
                  %v1024 = vld [vmem:[%s1020 + $0x8] sm:$0xff]
                  %1025 = vst [vmem:[%s1021 + $0x8] sm:$0xff] %v1024
                  %v1026 = vld [vmem:[%s1020 + $0x10] sm:$0xff]
                  %1027 = vst [vmem:[%s1021 + $0x10] sm:$0xff] %v1026
                  %v1028 = vld [vmem:[%s1020 + $0x18] sm:$0xff]
                  %1029 = vst [vmem:[%s1021 + $0x18] sm:$0xff] %v1028
                  %v1030 = vld [vmem:[%s1020 + $0x20] sm:$0xff]
                  %1031 = vst [vmem:[%s1021 + $0x20] sm:$0xff] %v1030
                  %v1032 = vld [vmem:[%s1020 + $0x28] sm:$0xff]
                  %1033 = vst [vmem:[%s1021 + $0x28] sm:$0xff] %v1032
                  %v1034 = vld [vmem:[%s1020 + $0x30] sm:$0xff]
                  %1035 = vst [vmem:[%s1021 + $0x30] sm:$0xff] %v1034
                  %v1036 = vld [vmem:[%s1020 + $0x38] sm:$0xff]
                  %1037 = vst [vmem:[%s1021 + $0x38] sm:$0xff] %v1036
                  %v1038 = vld [vmem:[%s1020 + $0x40] sm:$0xff]
                  %1039 = vst [vmem:[%s1021 + $0x40] sm:$0xff] %v1038
                  %v1040 = vld [vmem:[%s1020 + $0x48] sm:$0xff]
                  %1041 = vst [vmem:[%s1021 + $0x48] sm:$0xff] %v1040
                  %v1042 = vld [vmem:[%s1020 + $0x50] sm:$0xff]
                  %1043 = vst [vmem:[%s1021 + $0x50] sm:$0xff] %v1042
                  %v1044 = vld [vmem:[%s1020 + $0x58] sm:$0xff]
                  %1045 = vst [vmem:[%s1021 + $0x58] sm:$0xff] %v1044
                  %v1046 = vld [vmem:[%s1020 + $0x60] sm:$0xff]
                  %1047 = vst [vmem:[%s1021 + $0x60] sm:$0xff] %v1046
                  %v1048 = vld [vmem:[%s1020 + $0x68] sm:$0xff]
                  %1049 = vst [vmem:[%s1021 + $0x68] sm:$0xff] %v1048
                  %v1050 = vld [vmem:[%s1020 + $0x70] sm:$0xff]
                  %1051 = vst [vmem:[%s1021 + $0x70] sm:$0xff] %v1050
                  %v1052 = vld [vmem:[%s1020 + $0x78] sm:$0xff]
                  %1053 = vst [vmem:[%s1021 + $0x78] sm:$0xff] %v1052
                  %s1054 = sadd.s32 1, %s1019
                  %p1055 = scmp.ge.s32.totalorder %s1054, %s1012
                  %s1056 = scalar_select %p1055, 0, %s1054
                  %s1057 = smul.u32 %s1056, 128
                  %s1058 = smul.u32 %s1056, 128
                  %s1059 = scalar_lea.vmem %s915, %s1057 [#allocation2]
                  %s1060 = scalar_lea.vmem %s926, %s1058
                $region95: #{mlp_forward.1} parent=89 // loop_footer
                  %s1016 = sadd.s32 %s1014, 1
                $region96: #{mlp_forward.1} parent=89 // loop_footer_branch
                  %1013 = sbr.rel target = $region92
                $region97: #{mlp_forward.1} parent=89 // loop_exit
                  _
                %s1061 = sshrl.u32 %s922, 4
                %s1062 = sand.u32 %s922, 15
                %s1063 = smul.u32 %s1061, 16
                %s1064 = smul.u32 8, %s1063
                %s1065 = scalar_lea.vmem %s915, %s1064 [#allocation2]
                %s1066 = smul.u32 8, %s1063
                %s1067 = scalar_lea.vmem %s926, %s1066
                // While loop
                $region98: #{mlp_forward.1} parent=89 // loop_pre_header
                  _
                $region99: #{mlp_forward.1} parent=89 // loop_header
                  %s1069 = sphi 0, %s1071
                  %p1070 = scmp.ge.s32.totalorder %s1069, %s1062
                  %s1074 = sphi 0, %s1081
                  %s1075 = sphi %s1065, %s1084
                  %s1076 = sphi %s1067, %s1085
                $region100: #{mlp_forward.1} parent=89 // loop_header_branch
                  %1073 = sbr.rel (%p1070) target = $region104
                $region101: #{mlp_forward.1} parent=89 // loop_body
                  %v1077 = vld [vmem:[%s1075] sm:$0xff]
                  %1078 = vst [vmem:[%s1076] sm:$0xff] %v1077
                  %s1079 = sadd.s32 1, %s1074
                  %p1080 = scmp.ge.s32.totalorder %s1079, %s1062
                  %s1081 = scalar_select %p1080, 0, %s1079
                  %s1082 = smul.u32 %s1081, 8
                  %s1083 = smul.u32 %s1081, 8
                  %s1084 = scalar_lea.vmem %s1065, %s1082 [#allocation2]
                  %s1085 = scalar_lea.vmem %s1067, %s1083
                $region102: #{mlp_forward.1} parent=89 // loop_footer
                  %s1071 = sadd.s32 %s1069, 1
                $region103: #{mlp_forward.1} parent=89 // loop_footer_branch
                  %1068 = sbr.rel target = $region99
                $region104: #{mlp_forward.1} parent=89 // loop_exit
                  _
              $region90: #{mlp_forward.1} parent=67 // pred_fallthru
                _
              // Predicated region
              $region105: #{mlp_forward.1} parent=67 // pred_check
                _
              $region106: #{mlp_forward.1} parent=67 // pred_check_branch
                %1087 = sbr.rel target = $region108
              $region107: #{mlp_forward.1} parent=67 // pred_region
                _
              $region108: #{mlp_forward.1} parent=67 // pred_fallthru
                _
            $region68: #{mlp_forward.1} parent=63 // pred_fallthru
              _
            // Predicated region
            $region69: #{mlp_forward.1} parent=63 // pred_check
              _
            $region70: #{mlp_forward.1} parent=63 // pred_check_branch
              %933 = sbr.rel target = $region72
            $region71: #{mlp_forward.1} parent=63 // pred_region
              %s935 = ssub.s32 256, 1
              %s936 = sshrl.u32 %s922, 4
              // While loop
              $region73: #{mlp_forward.1} parent=71 // loop_pre_header
                _
              $region74: #{mlp_forward.1} parent=71 // loop_header
                %s938 = sphi 0, %s940
                %p939 = scmp.ge.s32.totalorder %s938, %s936
                %s943 = sphi 0, %s980
                %s944 = sphi %s915, %s983
                %s945 = sphi %s926, %s984
              $region75: #{mlp_forward.1} parent=71 // loop_header_branch
                %942 = sbr.rel (%p939) target = $region79
              $region76: #{mlp_forward.1} parent=71 // loop_body
                %v946 = vld [vmem:[%s944] sm:%s935]
                %947 = vst [vmem:[%s945] sm:%s935] %v946
                %v948 = vld [vmem:[%s944 + $0x8] sm:%s935]
                %949 = vst [vmem:[%s945 + $0x8] sm:%s935] %v948
                %v950 = vld [vmem:[%s944 + $0x10] sm:%s935]
                %951 = vst [vmem:[%s945 + $0x10] sm:%s935] %v950
                %v952 = vld [vmem:[%s944 + $0x18] sm:%s935]
                %953 = vst [vmem:[%s945 + $0x18] sm:%s935] %v952
                %v954 = vld [vmem:[%s944 + $0x20] sm:%s935]
                %955 = vst [vmem:[%s945 + $0x20] sm:%s935] %v954
                %v956 = vld [vmem:[%s944 + $0x28] sm:%s935]
                %957 = vst [vmem:[%s945 + $0x28] sm:%s935] %v956
                %v958 = vld [vmem:[%s944 + $0x30] sm:%s935]
                %959 = vst [vmem:[%s945 + $0x30] sm:%s935] %v958
                %v960 = vld [vmem:[%s944 + $0x38] sm:%s935]
                %961 = vst [vmem:[%s945 + $0x38] sm:%s935] %v960
                %v962 = vld [vmem:[%s944 + $0x40] sm:%s935]
                %963 = vst [vmem:[%s945 + $0x40] sm:%s935] %v962
                %v964 = vld [vmem:[%s944 + $0x48] sm:%s935]
                %965 = vst [vmem:[%s945 + $0x48] sm:%s935] %v964
                %v966 = vld [vmem:[%s944 + $0x50] sm:%s935]
                %967 = vst [vmem:[%s945 + $0x50] sm:%s935] %v966
                %v968 = vld [vmem:[%s944 + $0x58] sm:%s935]
                %969 = vst [vmem:[%s945 + $0x58] sm:%s935] %v968
                %v970 = vld [vmem:[%s944 + $0x60] sm:%s935]
                %971 = vst [vmem:[%s945 + $0x60] sm:%s935] %v970
                %v972 = vld [vmem:[%s944 + $0x68] sm:%s935]
                %973 = vst [vmem:[%s945 + $0x68] sm:%s935] %v972
                %v974 = vld [vmem:[%s944 + $0x70] sm:%s935]
                %975 = vst [vmem:[%s945 + $0x70] sm:%s935] %v974
                %v976 = vld [vmem:[%s944 + $0x78] sm:%s935]
                %977 = vst [vmem:[%s945 + $0x78] sm:%s935] %v976
                %s978 = sadd.s32 1, %s943
                %p979 = scmp.ge.s32.totalorder %s978, %s936
                %s980 = scalar_select %p979, 0, %s978
                %s981 = smul.u32 %s980, 128
                %s982 = smul.u32 %s980, 128
                %s983 = scalar_lea.vmem %s915, %s981 [#allocation2]
                %s984 = scalar_lea.vmem %s926, %s982
              $region77: #{mlp_forward.1} parent=71 // loop_footer
                %s940 = sadd.s32 %s938, 1
              $region78: #{mlp_forward.1} parent=71 // loop_footer_branch
                %937 = sbr.rel target = $region74
              $region79: #{mlp_forward.1} parent=71 // loop_exit
                _
              %s985 = sshrl.u32 %s922, 4
              %s986 = sand.u32 %s922, 15
              %s987 = smul.u32 %s985, 16
              %s988 = smul.u32 8, %s987
              %s989 = scalar_lea.vmem %s915, %s988 [#allocation2]
              %s990 = smul.u32 8, %s987
              %s991 = scalar_lea.vmem %s926, %s990
              // While loop
              $region80: #{mlp_forward.1} parent=71 // loop_pre_header
                _
              $region81: #{mlp_forward.1} parent=71 // loop_header
                %s993 = sphi 0, %s995
                %p994 = scmp.ge.s32.totalorder %s993, %s986
                %s998 = sphi 0, %s1005
                %s999 = sphi %s989, %s1008
                %s1000 = sphi %s991, %s1009
              $region82: #{mlp_forward.1} parent=71 // loop_header_branch
                %997 = sbr.rel (%p994) target = $region86
              $region83: #{mlp_forward.1} parent=71 // loop_body
                %v1001 = vld [vmem:[%s999] sm:%s935]
                %1002 = vst [vmem:[%s1000] sm:%s935] %v1001
                %s1003 = sadd.s32 1, %s998
                %p1004 = scmp.ge.s32.totalorder %s1003, %s986
                %s1005 = scalar_select %p1004, 0, %s1003
                %s1006 = smul.u32 %s1005, 8
                %s1007 = smul.u32 %s1005, 8
                %s1008 = scalar_lea.vmem %s989, %s1006 [#allocation2]
                %s1009 = scalar_lea.vmem %s991, %s1007
              $region84: #{mlp_forward.1} parent=71 // loop_footer
                %s995 = sadd.s32 %s993, 1
              $region85: #{mlp_forward.1} parent=71 // loop_footer_branch
                %992 = sbr.rel target = $region81
              $region86: #{mlp_forward.1} parent=71 // loop_exit
                _
            $region72: #{mlp_forward.1} parent=63 // pred_fallthru
              _
          $region64: #{mlp_forward.1} parent=59 // pred_fallthru
            _
          %1088 = vnop
        $region60: #{mlp_forward.1} parent=55 // pred_fallthru
          _
      $region56: #{mlp_forward.1} parent=5 // pred_fallthru
        _
      %p1089 = scmp.le.s32.totalorder 2, %s15
      // Predicated region
      $region109: #{mlp_forward.1} parent=5 // pred_check
        %p1090 = pneg %p1089
      $region110: #{mlp_forward.1} parent=5 // pred_check_branch
        %1092 = sbr.rel (%p1090) target = $region112
      $region111: #{mlp_forward.1} parent=5 // pred_region
        %s1093 = ssub.s32 %s15, 2
        // Predicated region
        $region113: #{mlp_forward.1} parent=111 // pred_check
          %p1094 = pneg %p238
        $region114: #{mlp_forward.1} parent=111 // pred_check_branch
          %1096 = sbr.rel (%p1094) target = $region116
        $region115: #{mlp_forward.1} parent=111 // pred_region
          %s1097 = sand.u32 %s223, 1
          %s1098 = sand.u32 %s223, 1
          %s1099 = smul.addr %s1098, 128
          %s1100 = scalar_lea.vmem [#allocation2], %s1099
        $region116: #{mlp_forward.1} parent=111 // pred_fallthru
          _
      $region112: #{mlp_forward.1} parent=5 // pred_fallthru
        _
    $region6: #{mlp_forward.1} parent=1 // loop_footer
      %s19 = sadd.s32 1, %s15
    $region7: #{mlp_forward.1} parent=1 // loop_footer_branch
      %14 = sbr.rel target = $region3
    $region8: #{mlp_forward.1} parent=1 // loop_exit
      _

</llo_original>
